<compile_context>
chip_gen: v7x
topology: tpu7x:2x2x1
jax: 0.10.0
libtpu: 0.0.40
codegen_flags: <defaults>
</compile_context>

<pallas_src>
import functools

import jax
import jax.numpy as jnp
from jax import lax
from jax.experimental import pallas as pl
from jax.experimental.pallas import tpu as pltpu


def _psi_kernel(x_ref, o_ref, *, block_size, width, mm_precision):
    """One grid step == one (batch, row-tile) of the flattened input view.

    x_ref : (1, tr, bl*W)          rows are (c, nh) pairs; lanes encode (i, m, j)
    o_ref : (1, bl*bl, tr, new_w)  plane (i*bl + j) holds x[..., nh*bl+i, m*bl+j]
    """
    bl = block_size
    W = width
    new_w = W // bl

    tile = x_ref[0]                                       # (tr, bl*W), lane-dense load

    # One-hot column-permutation matrix built in-kernel (VPU iota compares,
    # zero HBM traffic for selectors):
    #   sel[w, j*new_w + m] = 1  iff  w == m*bl + j
    w_iota = lax.broadcasted_iota(jnp.int32, (W, W), 0)
    k_iota = lax.broadcasted_iota(jnp.int32, (W, W), 1)
    # j = k // new_w via compare-sum (avoids vector integer div), m = k - j*new_w
    j_idx = jnp.zeros((W, W), jnp.int32)
    for t in range(1, bl):
        j_idx = j_idx + (k_iota >= t * new_w).astype(jnp.int32)
    m_idx = k_iota - j_idx * new_w
    sel = (w_iota == m_idx * bl + j_idx).astype(tile.dtype)

    for i in range(bl):                                   # static unroll (small bl)
        # Row phase i: static contiguous lane slice, no matmul needed.
        rows_i = tile[:, i * W:(i + 1) * W]               # (tr, W)
        # All column phases j fused into one permutation matmul (exact).
        grouped = jnp.dot(rows_i, sel,
                          preferred_element_type=jnp.float32,
                          precision=mm_precision)          # (tr, bl*new_w) = (tr, W)
        for j in range(bl):
            o_ref[0, i * bl + j, :, :] = (
                grouped[:, j * new_w:(j + 1) * new_w].astype(o_ref.dtype))


def _pick_row_tile(total_rows, row_bytes, target_bytes=2 << 20):
    """Largest row tile (multiple of 8, dividing total_rows) within the budget."""
    max_rows = max(8, target_bytes // max(row_bytes, 1))
    if total_rows <= max_rows:
        return total_rows
    t = int(max_rows) - int(max_rows) % 8
    while t >= 8:
        if total_rows % t == 0:
            return t
        t -= 8
    return total_rows  # fallback: single tile per batch element


def psi_forward(x, block_size):
    """Pallas implementation of psi.forward for NCHW `x`."""
    bs, d, H, W = x.shape
    bl = block_size
    bl_sq = bl * bl
    assert H % bl == 0 and W % bl == 0
    new_h, new_w = H // bl, W // bl
    rows = d * new_h

    # Pure view reshape (no data movement): x_r[b, c*new_h + nh, i*W + m*bl + j]
    x_r = x.reshape(bs, rows, bl * W)

    tr = _pick_row_tile(rows, bl * W * x.dtype.itemsize)
    n_row_tiles = rows // tr

    # Exact selection: f32 stays exact on the MXU only with HIGHEST; bf16 is
    # already exact at default precision (and 3-6x cheaper).
    mm_precision = (lax.Precision.HIGHEST if x.dtype == jnp.float32
                    else lax.Precision.DEFAULT)

    kernel = functools.partial(_psi_kernel, block_size=bl, width=W,
                               mm_precision=mm_precision)

    out = pl.pallas_call(
        kernel,
        grid=(bs, n_row_tiles),
        in_specs=[pl.BlockSpec((1, tr, bl * W), lambda b, r: (b, r, 0))],
        out_specs=pl.BlockSpec((1, bl_sq, tr, new_w), lambda b, r: (b, 0, r, 0)),
        out_shape=jax.ShapeDtypeStruct((bs, bl_sq, rows, new_w), x.dtype),
        compiler_params=pltpu.CompilerParams(
            dimension_semantics=("parallel", "parallel"),
            vmem_limit_bytes=32 * 1024 * 1024),
    )(x_r)

    # Pure view reshape: (bs, bl^2, d*new_h, new_w) -> (bs, d*bl^2, new_h, new_w)
    # (channel order is (i, j, c)-major, matching the PyTorch permute).
    return out.reshape(bs, d * bl_sq, new_h, new_w)


def psi_reference(x, bl):
    """Direct port of the PyTorch forward (reshape/permute/reshape) in jnp."""
    bs, d, H, W = x.shape
    new_h, new_w = H // bl, W // bl
    y = x.reshape(bs, d, new_h, bl, new_w, bl)
    y = jnp.transpose(y, (0, 3, 5, 1, 2, 4))
    return y.reshape(bs, d * bl * bl, new_h, new_w)


if __name__ == "__main__":
    key = jax.random.PRNGKey(0)
    block_size = 2
    # small NCHW input consistent with the module: (batch=2, channels=4, 16, 16)
    x = jax.random.normal(key, (2, 4, 16, 16), dtype=jnp.float32)

    out = jax.block_until_ready(psi_forward(x, block_size))
    ref = psi_reference(x, block_size)

    assert out.shape == (2, 4 * block_size * block_size, 8, 8), out.shape
    assert jnp.allclose(out, ref, atol=1e-5, rtol=1e-5), float(
        jnp.max(jnp.abs(out - ref)))
    print("KERNEL_OK")
</pallas_src>

<mosaic_0001>
module attributes {stable_mosaic.version = 11 : i64} {
  func.func @_psi_kernel(%arg0: i32, %arg1: i32, %arg2: memref<1x32x32xf32, #tpu.memory_space<vmem>>, %arg3: memref<1x4x32x8xf32, #tpu.memory_space<vmem>>) attributes {dimension_semantics = [#tpu.dimension_semantics<parallel>, #tpu.dimension_semantics<parallel>], iteration_bounds = array<i64: 2, 1>, scalar_prefetch = 0 : i64, scratch_operands = 0 : i64, tpu.core_type = #tpu.core_type<tc>, window_params = [{transform_indices = @transform_0, window_bounds = array<i64: 1, 32, 32>}, {transform_indices = @transform_1, window_bounds = array<i64: 1, 4, 32, 8>}]} {
    %c0 = arith.constant 0 : index
    %c0_0 = arith.constant 0 : index
    %c0_1 = arith.constant 0 : index
    %0 = vector.load %arg2[%c0, %c0_0, %c0_1] : memref<1x32x32xf32, #tpu.memory_space<vmem>>, vector<1x32x32xf32>
    %1 = vector.shape_cast %0 : vector<1x32x32xf32> to vector<32x32xf32>
    %2 = tpu.iota {dimensions = array<i32: 0>} : vector<16x16xi32>
    %3 = tpu.iota {dimensions = array<i32: 1>} : vector<16x16xi32>
    %c0_i32 = arith.constant 0 : i32
    %4 = vector.broadcast %c0_i32 : i32 to vector<16x16xi32>
    %c8_i32 = arith.constant 8 : i32
    %5 = vector.broadcast %c8_i32 : i32 to vector<16x16xi32>
    %6 = arith.cmpi sge, %3, %5 : vector<16x16xi32>
    %7 = arith.extui %6 : vector<16x16xi1> to vector<16x16xi32>
    %8 = arith.addi %4, %7 : vector<16x16xi32>
    %c8_i32_2 = arith.constant 8 : i32
    %9 = vector.broadcast %c8_i32_2 : i32 to vector<16x16xi32>
    %10 = arith.muli %8, %9 : vector<16x16xi32>
    %11 = arith.subi %3, %10 : vector<16x16xi32>
    %c2_i32 = arith.constant 2 : i32
    %12 = vector.broadcast %c2_i32 : i32 to vector<16x16xi32>
    %13 = arith.muli %11, %12 : vector<16x16xi32>
    %14 = arith.addi %13, %8 : vector<16x16xi32>
    %15 = arith.cmpi eq, %2, %14 : vector<16x16xi32>
    %16 = arith.extui %15 : vector<16x16xi1> to vector<16x16xi32>
    %17 = arith.sitofp %16 : vector<16x16xi32> to vector<16x16xf32>
    %18 = vector.extract_strided_slice %1 {offsets = [0, 0], sizes = [32, 16], strides = [1, 1]} : vector<32x32xf32> to vector<32x16xf32>
    %cst = arith.constant dense<0.000000e+00> : vector<32x16xf32>
    %19 = tpu.matmul %18, %17, %cst {dimension_numbers = #tpu.dot_dimension_numbers<[1], [0], [0], [1], [0, 0, 1, 1], [], []>, precision = #tpu.contract_precision<fp32>} : vector<32x16xf32>, vector<16x16xf32>, vector<32x16xf32> -> vector<32x16xf32>
    %20 = vector.extract_strided_slice %19 {offsets = [0, 0], sizes = [32, 8], strides = [1, 1]} : vector<32x16xf32> to vector<32x8xf32>
    %c0_3 = arith.constant 0 : index
    %c0_4 = arith.constant 0 : index
    %c0_5 = arith.constant 0 : index
    %c0_6 = arith.constant 0 : index
    %21 = vector.load %arg3[%c0_3, %c0_4, %c0_5, %c0_6] : memref<1x4x32x8xf32, #tpu.memory_space<vmem>>, vector<1x1x32x8xf32>
    %22 = vector.shape_cast %21 : vector<1x1x32x8xf32> to vector<32x8xf32>
    %23 = vector.shape_cast %20 : vector<32x8xf32> to vector<1x1x32x8xf32>
    tpu.vector_store %arg3[%c0_3, %c0_4, %c0_5, %c0_6], %23 {strides = array<i32>} : memref<1x4x32x8xf32, #tpu.memory_space<vmem>>, vector<1x1x32x8xf32>,
    %24 = vector.extract_strided_slice %19 {offsets = [0, 8], sizes = [32, 8], strides = [1, 1]} : vector<32x16xf32> to vector<32x8xf32>
    %c0_7 = arith.constant 0 : index
    %c1 = arith.constant 1 : index
    %c0_8 = arith.constant 0 : index
    %c0_9 = arith.constant 0 : index
    %25 = vector.load %arg3[%c0_7, %c1, %c0_8, %c0_9] : memref<1x4x32x8xf32, #tpu.memory_space<vmem>>, vector<1x1x32x8xf32>
    %26 = vector.shape_cast %25 : vector<1x1x32x8xf32> to vector<32x8xf32>
    %27 = vector.shape_cast %24 : vector<32x8xf32> to vector<1x1x32x8xf32>
    tpu.vector_store %arg3[%c0_7, %c1, %c0_8, %c0_9], %27 {strides = array<i32>} : memref<1x4x32x8xf32, #tpu.memory_space<vmem>>, vector<1x1x32x8xf32>,
    %28 = vector.extract_strided_slice %1 {offsets = [0, 16], sizes = [32, 16], strides = [1, 1]} : vector<32x32xf32> to vector<32x16xf32>
    %cst_10 = arith.constant dense<0.000000e+00> : vector<32x16xf32>
    %29 = tpu.matmul %28, %17, %cst_10 {dimension_numbers = #tpu.dot_dimension_numbers<[1], [0], [0], [1], [0, 0, 1, 1], [], []>, precision = #tpu.contract_precision<fp32>} : vector<32x16xf32>, vector<16x16xf32>, vector<32x16xf32> -> vector<32x16xf32>
    %30 = vector.extract_strided_slice %29 {offsets = [0, 0], sizes = [32, 8], strides = [1, 1]} : vector<32x16xf32> to vector<32x8xf32>
    %c0_11 = arith.constant 0 : index
    %c2 = arith.constant 2 : index
    %c0_12 = arith.constant 0 : index
    %c0_13 = arith.constant 0 : index
    %31 = vector.load %arg3[%c0_11, %c2, %c0_12, %c0_13] : memref<1x4x32x8xf32, #tpu.memory_space<vmem>>, vector<1x1x32x8xf32>
    %32 = vector.shape_cast %31 : vector<1x1x32x8xf32> to vector<32x8xf32>
    %33 = vector.shape_cast %30 : vector<32x8xf32> to vector<1x1x32x8xf32>
    tpu.vector_store %arg3[%c0_11, %c2, %c0_12, %c0_13], %33 {strides = array<i32>} : memref<1x4x32x8xf32, #tpu.memory_space<vmem>>, vector<1x1x32x8xf32>,
    %34 = vector.extract_strided_slice %29 {offsets = [0, 8], sizes = [32, 8], strides = [1, 1]} : vector<32x16xf32> to vector<32x8xf32>
    %c0_14 = arith.constant 0 : index
    %c3 = arith.constant 3 : index
    %c0_15 = arith.constant 0 : index
    %c0_16 = arith.constant 0 : index
    %35 = vector.load %arg3[%c0_14, %c3, %c0_15, %c0_16] : memref<1x4x32x8xf32, #tpu.memory_space<vmem>>, vector<1x1x32x8xf32>
    %36 = vector.shape_cast %35 : vector<1x1x32x8xf32> to vector<32x8xf32>
    %37 = vector.shape_cast %34 : vector<32x8xf32> to vector<1x1x32x8xf32>
    tpu.vector_store %arg3[%c0_14, %c3, %c0_15, %c0_16], %37 {strides = array<i32>} : memref<1x4x32x8xf32, #tpu.memory_space<vmem>>, vector<1x1x32x8xf32>,
    return
  }
  func.func @transform_0(%arg0: i32, %arg1: i32) -> (i32, i32, i32) {
    %c0_i32 = arith.constant 0 : i32
    %c0_i32_0 = arith.constant 0 : i32
    return %arg0, %arg1, %c0_i32 : i32, i32, i32
  }
  func.func @transform_1(%arg0: i32, %arg1: i32) -> (i32, i32, i32, i32) {
    %c0_i32 = arith.constant 0 : i32
    %c0_i32_0 = arith.constant 0 : i32
    %c0_i32_1 = arith.constant 0 : i32
    return %arg0, %c0_i32, %arg1, %c0_i32_0 : i32, i32, i32, i32
  }
}

</mosaic_0001>

<llo_original>
// kernel: tpu_custom_call.1
$region0: #{tpu_custom_call.1}
  #allocation0 [shape = 'u32[]', space=smem, size = 0x4, offset = 0x4, fixed_abs, tag = 'smem constant byte address 0x4 - core index']
  #allocation1 [shape = 'u32[144,128]{1,0:T(1,128)}', space=vmem, size = 0x12000, scoped, tag = 'internal scratch']
  %s0 = inlined_call_operand.hbm [shape: f32[2,32,32], index: 0, kind: input, shape index: {}]
  %s1 = inlined_call_operand.vmem [shape: f32[2,4,32,8], index: 1, kind: output, shape index: {}]
  %s2 = sld [smem:[#allocation0]]
  $region41: #{tpu_custom_call.1} parent=0
    _
  %s4 = ssub.s32 1, %s2
  %s5 = scalar_select 0, %s4, %s2
  $region1: #{tpu_custom_call.1} parent=0
    #allocation2 [shape = 'u8[32768]{0}', space=vmem, size = 0x8000, scoped, tag = 'input window, operand 0']
    #allocation3 [shape = 's32[2]{0}', space=sflag, size = 0x8, scoped, tag = 'scoped memory for tpu_custom_call.1']
    %6 = vsyncpa [#allocation3], 0
    %s7 = scalar_lea.sflag [#allocation3], 1
    %8 = vsyncpa %s7, 0
    loop: start=0, step=1, limit=4
    $region2: #{tpu_custom_call.1} parent=1 // loop_pre_header
      _
    $region3: #{tpu_custom_call.1} parent=1 // loop_header
      %s10 = sphi 0, %s14
      %p11 = scmp.ge.s32.totalorder %s10, 4
      %s17 = sphi 0, %s29
      %s18 = sphi 0, %s25
      %s19 = sphi 0, %s17
      %s20 = sphi 0, %s18
      %s21 = sphi 0, %s19
      %s22 = sphi 0, %s20
      %s34 = sphi 0, %s36
      %s37 = sphi 0, %s34
      %s38 = sphi 0, %s37
      %s54 = sphi 0, %s38
      %s62 = sphi 0, %s64
      %s65 = sphi 0, %s62
      %s66 = sphi 0, %s65
      %s82 = sphi 0, %s66
    $region4: #{tpu_custom_call.1} parent=1 // loop_header_branch
      %13 = sbr.rel (%p11) target = $region8
    $region5: #{tpu_custom_call.1} parent=1 // loop_body
      %s15 = ssub.s32 %s10, 1
      %s16 = ssub.s32 %s10, 2
      %s23 = sadd.s32 1, %s18
      %p24 = scmp.ge.s32.totalorder %s23, 1
      %s25 = scalar_select %p24, 0, %s23
      %s26 = sadd.s32 1, %s17
      %s27 = scalar_select %p24, %s26, %s17
      %p28 = scmp.ge.s32.totalorder %s27, 2
      %s29 = scalar_select %p28, 0, %s27
      %s30 = ssub.s32 %s17, %s29
      %s31 = ssub.s32 %s18, %s25
      %s32 = sor.u32 %s30, %s31
      %p33 = scmp.eq.s32.totalorder %s32, 0
      %s35 = sadd.s32 %s34, 1
      %s36 = scalar_select %p33, %s34, %s35
      %p39 = pneg %p33
      %p40 = scmp.eq.s32.totalorder %s10, 1
      %p41 = por %p39, %p40
      %p42 = scmp.ne.s32.totalorder %s34, %s37
      %p43 = scmp.eq.s32.totalorder %s10, 0
      %p44 = por %p42, %p43
      %p45 = scmp.ne.s32.totalorder %s34, %s37
      %p46 = scmp.eq.s32.totalorder %s15, 1
      %p47 = por %p45, %p46
      %p48 = scmp.ne.s32.totalorder %s37, %s38
      %p49 = scmp.eq.s32.totalorder %s15, 0
      %p50 = por %p48, %p49
      %p51 = scmp.ne.s32.totalorder %s37, %s38
      %p52 = scmp.eq.s32.totalorder %s16, 1
      %p53 = por %p51, %p52
      %p55 = scmp.ne.s32.totalorder %s38, %s54
      %p56 = scmp.eq.s32.totalorder %s16, 0
      %p57 = por %p55, %p56
      %s58 = ssub.s32 %s17, %s29
      %s59 = ssub.s32 %s18, %s25
      %s60 = sor.u32 %s58, %s59
      %p61 = scmp.eq.s32.totalorder %s60, 0
      %s63 = sadd.s32 %s62, 1
      %s64 = scalar_select %p61, %s62, %s63
      %p67 = pneg %p61
      %p68 = scmp.eq.s32.totalorder %s10, 1
      %p69 = por %p67, %p68
      %p70 = scmp.ne.s32.totalorder %s62, %s65
      %p71 = scmp.eq.s32.totalorder %s10, 0
      %p72 = por %p70, %p71
      %p73 = scmp.ne.s32.totalorder %s62, %s65
      %p74 = scmp.eq.s32.totalorder %s15, 1
      %p75 = por %p73, %p74
      %p76 = scmp.ne.s32.totalorder %s65, %s66
      %p77 = scmp.eq.s32.totalorder %s15, 0
      %p78 = por %p76, %p77
      %p79 = scmp.ne.s32.totalorder %s65, %s66
      %p80 = scmp.eq.s32.totalorder %s16, 1
      %p81 = por %p79, %p80
      %p83 = scmp.ne.s32.totalorder %s66, %s82
      %p84 = scmp.eq.s32.totalorder %s16, 0
      %p85 = por %p83, %p84
      %p86 = scmp.le.s32.totalorder 1, %s10
      %p87 = scmp.lt.s32.totalorder %s10, 3
      %p88 = pnand %p86, %p87
      %p89 = pneg %p88
      // Predicated region
      $region9: #{tpu_custom_call.1} parent=5 // pred_check
        _
      $region10: #{tpu_custom_call.1} parent=5 // pred_check_branch
        %91 = sbr.rel (%p88) target = $region12
      $region11: #{tpu_custom_call.1} parent=5 // pred_region
        %s92 = ssub.s32 %s10, 1
      $region12: #{tpu_custom_call.1} parent=5 // pred_fallthru
        _
      %p93 = scmp.lt.s32.totalorder %s10, 2
      // Predicated region
      $region13: #{tpu_custom_call.1} parent=5 // pred_check
        %p94 = pneg %p93
      $region14: #{tpu_custom_call.1} parent=5 // pred_check_branch
        %96 = sbr.rel (%p94) target = $region16
      $region15: #{tpu_custom_call.1} parent=5 // pred_region
        // Predicated region
        $region17: #{tpu_custom_call.1} parent=15 // pred_check
          %p97 = pneg %p44
        $region18: #{tpu_custom_call.1} parent=15 // pred_check_branch
          %99 = sbr.rel (%p97) target = $region20
        $region19: #{tpu_custom_call.1} parent=15 // pred_region
          %s100 = sand.u32 %s34, 1
          %s101 = scalar_lea.sflag [#allocation3], %s100
          %s102 = sand.u32 %s34, 1
          %s103 = smul.addr %s102, 32
          %s104 = scalar_lea.vmem [#allocation2], %s103
          %s105 = smul.u32 4, %s18
          %s107 = ssub.s32 512, 512
          %108 = vsyncadd %s101, %s107
          %s109 = smul.addr %s17, 4
          %s110 = sadd.s32 %s105, %s109
          %s111 = smul.addr %s110, 128
          %s112 = scalar_lea.hbm %s0, %s111
          %s113 = sshll.u32 %s104, 4
          %s114 = int_to_ptr.vmem [resolvable:$true] %s113
          %119 = dma.hbm_to_vmem [thread:$0]  %s112, 512, %s114, %s101, 128, 128, 8
        $region20: #{tpu_custom_call.1} parent=15 // pred_fallthru
          _
      $region16: #{tpu_custom_call.1} parent=5 // pred_fallthru
        _
      %p120 = scmp.le.s32.totalorder 1, %s10
      %p121 = scmp.lt.s32.totalorder %s10, 3
      %p122 = pnand %p120, %p121
      %p123 = pneg %p122
      // Predicated region
      $region21: #{tpu_custom_call.1} parent=5 // pred_check
        _
      $region22: #{tpu_custom_call.1} parent=5 // pred_check_branch
        %125 = sbr.rel (%p122) target = $region24
      $region23: #{tpu_custom_call.1} parent=5 // pred_region
        %s126 = ssub.s32 %s10, 1
        %s127 = sand.u32 %s37, 1
        %s128 = scalar_lea.sflag [#allocation3], %s127
        %s129 = sand.u32 %s37, 1
        %s130 = smul.addr %s129, 32
        %s131 = scalar_lea.vmem [#allocation2], %s130
        // Predicated region
        $region25: #{tpu_custom_call.1} parent=23 // pred_check
          %p132 = pneg %p50
        $region26: #{tpu_custom_call.1} parent=23 // pred_check_branch
          %134 = sbr.rel (%p132) target = $region28
        $region27: #{tpu_custom_call.1} parent=23 // pred_region
          %135 = dma.done %s128, 512
        $region28: #{tpu_custom_call.1} parent=23 // pred_fallthru
          _
        %s136 = sand.u32 %s37, 1
        %s137 = scalar_lea.sflag [#allocation3], %s136
        %s138 = sand.u32 %s37, 1
        %s139 = smul.addr %s138, 32
        %s140 = scalar_lea.vmem [#allocation2], %s139
        %p141 = pneg %p50
        %p142 = pneg %p47
        %p143 = pneg %p78
        %p144 = pneg %p75
        %s145 = smul.u32 4, %s20
        %p146 = scmp.lt.s32.totalorder %s19, 1
        %s147 = scalar_select %p146, %s19, 1
        %p148 = scmp.lt.s32.totalorder %s145, 3
        %s149 = scalar_select %p148, %s145, 3
        %s150 = smul.addr %s147, 16
        %s151 = sadd.s32 %s149, %s150
        %s152 = smul.addr %s151, 8
        %s153 = scalar_lea.vmem %s1, %s152
        %s154 = smul.u32 4, %s20
        %s155 = smul.u32 4, %s20
        %p156 = scmp.lt.s32.totalorder %s19, 1
        %s157 = scalar_select %p156, %s19, 1
        %p158 = scmp.lt.s32.totalorder %s155, 3
        %s159 = scalar_select %p158, %s155, 3
        %s160 = smul.addr %s157, 16
        %s161 = sadd.s32 %s159, %s160
        %s162 = smul.addr %s161, 8
        %s163 = scalar_lea.vmem %s1, %s162
        %s164 = smul.u32 4, %s20
        %v165 = vld [vmem:[%s131] sm:$0xff]
        %v166 = vld [vmem:[%s131 + $0x8] sm:$0xff]
        %v167 = vld [vmem:[%s131 + $0x10] sm:$0xff]
        %v168 = vld [vmem:[%s131 + $0x18] sm:$0xff]
        %v169 = vlaneseq
        %v170 = vshrl.u32 %v169, 7
        %v171 = vadd.s32 %v170, 8
        %v172 = vlaneseq
        %v173 = vand.u32 %v172, 127
        %vm174 = vcmp.ge.s32.totalorder %v173, 8
        %v175 = vsel %vm174, 1, 0
        %v176 = vmul.u32 %v175, 8
        %v177 = vsub.s32 %v173, %v176
        %v178 = vmul.u32 %v177, 2
        %v179 = vadd.s32 %v178, %v175
        %vm180 = vcmp.eq.s32.totalorder %v170, %v179
        %vm181 = vcmp.eq.s32.totalorder %v171, %v179
        %v182 = vsel %vm180, 1, 0
        %v183 = vsel %vm181, 1, 0
        %v184 = vcvt.s32.f32 %v182
        %v185 = vcvt.s32.f32 %v183
        %vm186 = vcmask 130048
        %v188 = vsel %vm186, %v165, 0
        %v191 = vsel %vm186, %v166, 0
        %v194 = vsel %vm186, %v167, 0
        %v197 = vsel %vm186, %v168, 0
        %199 = vmatprep.subr.mxu0 0.0
        %v200 = vand.u32 %v184, 4294901760
        %201 = vmatpush1.msra.mxu0 %v200
        %202 = vmatprep.subr.mxu0 0.0
        %v203 = vand.u32 %v185, 4294901760
        %204 = vmatpush1.msra.mxu0 %v203
        %205 = vmatprep.subr.mxu0 0.0
        %206 = vmatpush1.msra.mxu0 0.0
        %207 = vmatprep.subr.mxu0 0.0
        %208 = vmatpush1.msra.mxu0 0.0
        %209 = vmatprep.subr.mxu0 0.0
        %210 = vmatpush1.msra.mxu0 0.0
        %211 = vmatprep.subr.mxu0 0.0
        %212 = vmatpush1.msra.mxu0 0.0
        %213 = vmatprep.subr.mxu0 0.0
        %214 = vmatpush1.msra.mxu0 0.0
        %215 = vmatprep.subr.mxu0 0.0
        %216 = vmatpush1.msra.mxu0 0.0
        %217 = vmatprep.subr.mxu0 0.0
        %218 = vmatpush1.msra.mxu0 0.0
        %219 = vmatprep.subr.mxu0 0.0
        %220 = vmatpush1.msra.mxu0 0.0
        %221 = vmatprep.subr.mxu0 0.0
        %222 = vmatpush1.msra.mxu0 0.0
        %223 = vmatprep.subr.mxu0 0.0
        %224 = vmatpush1.msra.mxu0 0.0
        %225 = vmatprep.subr.mxu0 0.0
        %226 = vmatpush1.msra.mxu0 0.0
        %227 = vmatprep.subr.mxu0 0.0
        %228 = vmatpush1.msra.mxu0 0.0
        %229 = vmatprep.subr.mxu0 0.0
        %230 = vmatpush1.msra.mxu0 0.0
        %231 = vmatprep.subr.mxu0 0.0
        %232 = vmatpush1.msra.mxu0 0.0
        %233 = vmatprep.subr.mxu0 0.0
        %234 = vmatpush1.msra.mxu0 0.0
        %235 = vmatprep.subr.mxu0 0.0
        %236 = vmatpush1.msra.mxu0 0.0
        %237 = vmatprep.subr.mxu0 0.0
        %238 = vmatpush1.msra.mxu0 0.0
        %239 = vmatprep.subr.mxu0 0.0
        %240 = vmatpush1.msra.mxu0 0.0
        %241 = vmatprep.subr.mxu0 0.0
        %242 = vmatpush1.msra.mxu0 0.0
        %243 = vmatprep.subr.mxu0 0.0
        %244 = vmatpush1.msra.mxu0 0.0
        %245 = vmatprep.subr.mxu0 0.0
        %246 = vmatpush1.msra.mxu0 0.0
        %247 = vmatprep.subr.mxu0 0.0
        %248 = vmatpush1.msra.mxu0 0.0
        %249 = vmatprep.subr.mxu0 0.0
        %250 = vmatpush1.msra.mxu0 0.0
        %251 = vmatprep.subr.mxu0 0.0
        %252 = vmatpush1.msra.mxu0 0.0
        %253 = vmatprep.subr.mxu0 0.0
        %254 = vmatpush1.msra.mxu0 0.0
        %255 = vmatprep.subr.mxu0 0.0
        %256 = vmatpush1.msra.mxu0 0.0
        %257 = vmatprep.subr.mxu0 0.0
        %258 = vmatpush1.msra.mxu0 0.0
        %259 = vmatprep.subr.mxu0 0.0
        %260 = vmatpush1.msra.mxu0 0.0
        %261 = vmatprep.subr.mxu0 0.0
        %262 = vmatpush1.msra.mxu0 0.0
        %263 = vmatprep.subr.mxu0 0.0
        %264 = vmatpush1.msra.mxu0 0.0
        %265 = vmatprep.mubr.f32.mxu0 0.0
        %v266 = vand.u32 %v188, 4294901760
        %v267 = vsub.f32 %v188, %v266
        %v268 = vand.u32 %v267, 4294901760
        %v269 = vsub.f32 %v267, %v268
        %v270 = vand.u32 %v269, 4294901760
        %271 = vmatmul.mubr.f32.gmra.mrb[0].mxu0 %v270
        %v272 = vpop.f32.mrb[0].mxu0
        %v273 = vadd.f32 0.0, %v272
        %v274 = vpop.f32.mrb[0].mxu0
        %275 = vmatprep.mubr.f32.mxu0 0.0
        %v276 = vand.u32 %v191, 4294901760
        %v277 = vsub.f32 %v191, %v276
        %v278 = vand.u32 %v277, 4294901760
        %v279 = vsub.f32 %v277, %v278
        %v280 = vand.u32 %v279, 4294901760
        %281 = vmatmul.mubr.f32.gmra.mrb[0].mxu0 %v280
        %v282 = vpop.f32.mrb[0].mxu0
        %v283 = vadd.f32 0.0, %v282
        %v284 = vpop.f32.mrb[0].mxu0
        %285 = vmatprep.mubr.f32.mxu0 0.0
        %v286 = vand.u32 %v194, 4294901760
        %v287 = vsub.f32 %v194, %v286
        %v288 = vand.u32 %v287, 4294901760
        %v289 = vsub.f32 %v287, %v288
        %v290 = vand.u32 %v289, 4294901760
        %291 = vmatmul.mubr.f32.gmra.mrb[0].mxu0 %v290
        %v292 = vpop.f32.mrb[0].mxu0
        %v293 = vadd.f32 0.0, %v292
        %v294 = vpop.f32.mrb[0].mxu0
        %295 = vmatprep.mubr.f32.mxu0 0.0
        %v296 = vand.u32 %v197, 4294901760
        %v297 = vsub.f32 %v197, %v296
        %v298 = vand.u32 %v297, 4294901760
        %v299 = vsub.f32 %v297, %v298
        %v300 = vand.u32 %v299, 4294901760
        %301 = vmatmul.mubr.f32.gmra.mrb[0].mxu0 %v300
        %v302 = vpop.f32.mrb[0].mxu0
        %v303 = vadd.f32 0.0, %v302
        %v304 = vpop.f32.mrb[0].mxu0
        %305 = vdwg.mxu0
        %306 = vmatprep.subr.mxu0 0.0
        %v307 = vand.u32 %v184, 4294901760
        %v308 = vsub.f32 %v184, %v307
        %v309 = vand.u32 %v308, 4294901760
        %v310 = vsub.f32 %v308, %v309
        %v311 = vand.u32 %v310, 4294901760
        %312 = vmatpush1.msra.mxu0 %v311
        %313 = vmatprep.subr.mxu0 0.0
        %v314 = vand.u32 %v185, 4294901760
        %v315 = vsub.f32 %v185, %v314
        %v316 = vand.u32 %v315, 4294901760
        %v317 = vsub.f32 %v315, %v316
        %v318 = vand.u32 %v317, 4294901760
        %319 = vmatpush1.msra.mxu0 %v318
        %320 = vmatprep.subr.mxu0 0.0
        %321 = vmatpush1.msra.mxu0 0.0
        %322 = vmatprep.subr.mxu0 0.0
        %323 = vmatpush1.msra.mxu0 0.0
        %324 = vmatprep.subr.mxu0 0.0
        %325 = vmatpush1.msra.mxu0 0.0
        %326 = vmatprep.subr.mxu0 0.0
        %327 = vmatpush1.msra.mxu0 0.0
        %328 = vmatprep.subr.mxu0 0.0
        %329 = vmatpush1.msra.mxu0 0.0
        %330 = vmatprep.subr.mxu0 0.0
        %331 = vmatpush1.msra.mxu0 0.0
        %332 = vmatprep.subr.mxu0 0.0
        %333 = vmatpush1.msra.mxu0 0.0
        %334 = vmatprep.subr.mxu0 0.0
        %335 = vmatpush1.msra.mxu0 0.0
        %336 = vmatprep.subr.mxu0 0.0
        %337 = vmatpush1.msra.mxu0 0.0
        %338 = vmatprep.subr.mxu0 0.0
        %339 = vmatpush1.msra.mxu0 0.0
        %340 = vmatprep.subr.mxu0 0.0
        %341 = vmatpush1.msra.mxu0 0.0
        %342 = vmatprep.subr.mxu0 0.0
        %343 = vmatpush1.msra.mxu0 0.0
        %344 = vmatprep.subr.mxu0 0.0
        %345 = vmatpush1.msra.mxu0 0.0
        %346 = vmatprep.subr.mxu0 0.0
        %347 = vmatpush1.msra.mxu0 0.0
        %348 = vmatprep.subr.mxu0 0.0
        %349 = vmatpush1.msra.mxu0 0.0
        %350 = vmatprep.subr.mxu0 0.0
        %351 = vmatpush1.msra.mxu0 0.0
        %352 = vmatprep.subr.mxu0 0.0
        %353 = vmatpush1.msra.mxu0 0.0
        %354 = vmatprep.subr.mxu0 0.0
        %355 = vmatpush1.msra.mxu0 0.0
        %356 = vmatprep.subr.mxu0 0.0
        %357 = vmatpush1.msra.mxu0 0.0
        %358 = vmatprep.subr.mxu0 0.0
        %359 = vmatpush1.msra.mxu0 0.0
        %360 = vmatprep.subr.mxu0 0.0
        %361 = vmatpush1.msra.mxu0 0.0
        %362 = vmatprep.subr.mxu0 0.0
        %363 = vmatpush1.msra.mxu0 0.0
        %364 = vmatprep.subr.mxu0 0.0
        %365 = vmatpush1.msra.mxu0 0.0
        %366 = vmatprep.subr.mxu0 0.0
        %367 = vmatpush1.msra.mxu0 0.0
        %368 = vmatprep.subr.mxu0 0.0
        %369 = vmatpush1.msra.mxu0 0.0
        %370 = vmatprep.subr.mxu0 0.0
        %371 = vmatpush1.msra.mxu0 0.0
        %372 = vmatprep.subr.mxu0 0.0
        %373 = vmatpush1.msra.mxu0 0.0
        %374 = vmatprep.subr.mxu0 0.0
        %375 = vmatpush1.msra.mxu0 0.0
        %376 = vmatprep.subr.mxu0 0.0
        %377 = vmatpush1.msra.mxu0 0.0
        %378 = vmatprep.subr.mxu0 0.0
        %379 = vmatpush1.msra.mxu0 0.0
        %380 = vmatprep.mubr.f32.mxu0 0.0
        %v381 = vand.u32 %v188, 4294901760
        %382 = vmatmul.mubr.f32.gmra.mrb[0].mxu0 %v381
        %v383 = vpop.f32.mrb[0].mxu0
        %v384 = vadd.f32 %v273, %v383
        %v385 = vpop.f32.mrb[0].mxu0
        %386 = vmatprep.mubr.f32.mxu0 0.0
        %v387 = vand.u32 %v191, 4294901760
        %388 = vmatmul.mubr.f32.gmra.mrb[0].mxu0 %v387
        %v389 = vpop.f32.mrb[0].mxu0
        %v390 = vadd.f32 %v283, %v389
        %v391 = vpop.f32.mrb[0].mxu0
        %392 = vmatprep.mubr.f32.mxu0 0.0
        %v393 = vand.u32 %v194, 4294901760
        %394 = vmatmul.mubr.f32.gmra.mrb[0].mxu0 %v393
        %v395 = vpop.f32.mrb[0].mxu0
        %v396 = vadd.f32 %v293, %v395
        %v397 = vpop.f32.mrb[0].mxu0
        %398 = vmatprep.mubr.f32.mxu0 0.0
        %v399 = vand.u32 %v197, 4294901760
        %400 = vmatmul.mubr.f32.gmra.mrb[0].mxu0 %v399
        %v401 = vpop.f32.mrb[0].mxu0
        %v402 = vadd.f32 %v303, %v401
        %v403 = vpop.f32.mrb[0].mxu0
        %404 = vdwg.mxu0
        %405 = vmatprep.subr.mxu0 0.0
        %v406 = vand.u32 %v184, 4294901760
        %v407 = vsub.f32 %v184, %v406
        %408 = vmatpush1.msra.mxu0 %v407
        %409 = vmatprep.subr.mxu0 0.0
        %v410 = vand.u32 %v185, 4294901760
        %v411 = vsub.f32 %v185, %v410
        %412 = vmatpush1.msra.mxu0 %v411
        %413 = vmatprep.subr.mxu0 0.0
        %414 = vmatpush1.msra.mxu0 0.0
        %415 = vmatprep.subr.mxu0 0.0
        %416 = vmatpush1.msra.mxu0 0.0
        %417 = vmatprep.subr.mxu0 0.0
        %418 = vmatpush1.msra.mxu0 0.0
        %419 = vmatprep.subr.mxu0 0.0
        %420 = vmatpush1.msra.mxu0 0.0
        %421 = vmatprep.subr.mxu0 0.0
        %422 = vmatpush1.msra.mxu0 0.0
        %423 = vmatprep.subr.mxu0 0.0
        %424 = vmatpush1.msra.mxu0 0.0
        %425 = vmatprep.subr.mxu0 0.0
        %426 = vmatpush1.msra.mxu0 0.0
        %427 = vmatprep.subr.mxu0 0.0
        %428 = vmatpush1.msra.mxu0 0.0
        %429 = vmatprep.subr.mxu0 0.0
        %430 = vmatpush1.msra.mxu0 0.0
        %431 = vmatprep.subr.mxu0 0.0
        %432 = vmatpush1.msra.mxu0 0.0
        %433 = vmatprep.subr.mxu0 0.0
        %434 = vmatpush1.msra.mxu0 0.0
        %435 = vmatprep.subr.mxu0 0.0
        %436 = vmatpush1.msra.mxu0 0.0
        %437 = vmatprep.subr.mxu0 0.0
        %438 = vmatpush1.msra.mxu0 0.0
        %439 = vmatprep.subr.mxu0 0.0
        %440 = vmatpush1.msra.mxu0 0.0
        %441 = vmatprep.subr.mxu0 0.0
        %442 = vmatpush1.msra.mxu0 0.0
        %443 = vmatprep.subr.mxu0 0.0
        %444 = vmatpush1.msra.mxu0 0.0
        %445 = vmatprep.subr.mxu0 0.0
        %446 = vmatpush1.msra.mxu0 0.0
        %447 = vmatprep.subr.mxu0 0.0
        %448 = vmatpush1.msra.mxu0 0.0
        %449 = vmatprep.subr.mxu0 0.0
        %450 = vmatpush1.msra.mxu0 0.0
        %451 = vmatprep.subr.mxu0 0.0
        %452 = vmatpush1.msra.mxu0 0.0
        %453 = vmatprep.subr.mxu0 0.0
        %454 = vmatpush1.msra.mxu0 0.0
        %455 = vmatprep.subr.mxu0 0.0
        %456 = vmatpush1.msra.mxu0 0.0
        %457 = vmatprep.subr.mxu0 0.0
        %458 = vmatpush1.msra.mxu0 0.0
        %459 = vmatprep.subr.mxu0 0.0
        %460 = vmatpush1.msra.mxu0 0.0
        %461 = vmatprep.subr.mxu0 0.0
        %462 = vmatpush1.msra.mxu0 0.0
        %463 = vmatprep.subr.mxu0 0.0
        %464 = vmatpush1.msra.mxu0 0.0
        %465 = vmatprep.subr.mxu0 0.0
        %466 = vmatpush1.msra.mxu0 0.0
        %467 = vmatprep.subr.mxu0 0.0
        %468 = vmatpush1.msra.mxu0 0.0
        %469 = vmatprep.subr.mxu0 0.0
        %470 = vmatpush1.msra.mxu0 0.0
        %471 = vmatprep.subr.mxu0 0.0
        %472 = vmatpush1.msra.mxu0 0.0
        %473 = vmatprep.mubr.f32.mxu0 0.0
        %v474 = vand.u32 %v188, 4294901760
        %v475 = vsub.f32 %v188, %v474
        %476 = vmatmul.mubr.f32.gmra.mrb[0].mxu0 %v475
        %v477 = vpop.f32.mrb[0].mxu0
        %v478 = vadd.f32 %v384, %v477
        %v479 = vpop.f32.mrb[0].mxu0
        %480 = vmatprep.mubr.f32.mxu0 0.0
        %v481 = vand.u32 %v191, 4294901760
        %v482 = vsub.f32 %v191, %v481
        %483 = vmatmul.mubr.f32.gmra.mrb[0].mxu0 %v482
        %v484 = vpop.f32.mrb[0].mxu0
        %v485 = vadd.f32 %v390, %v484
        %v486 = vpop.f32.mrb[0].mxu0
        %487 = vmatprep.mubr.f32.mxu0 0.0
        %v488 = vand.u32 %v194, 4294901760
        %v489 = vsub.f32 %v194, %v488
        %490 = vmatmul.mubr.f32.gmra.mrb[0].mxu0 %v489
        %v491 = vpop.f32.mrb[0].mxu0
        %v492 = vadd.f32 %v396, %v491
        %v493 = vpop.f32.mrb[0].mxu0
        %494 = vmatprep.mubr.f32.mxu0 0.0
        %v495 = vand.u32 %v197, 4294901760
        %v496 = vsub.f32 %v197, %v495
        %497 = vmatmul.mubr.f32.gmra.mrb[0].mxu0 %v496
        %v498 = vpop.f32.mrb[0].mxu0
        %v499 = vadd.f32 %v402, %v498
        %v500 = vpop.f32.mrb[0].mxu0
        %501 = vdwg.mxu0
        %502 = vmatprep.subr.mxu0 0.0
        %v503 = vand.u32 %v184, 4294901760
        %504 = vmatpush1.msra.mxu0 %v503
        %505 = vmatprep.subr.mxu0 0.0
        %v506 = vand.u32 %v185, 4294901760
        %507 = vmatpush1.msra.mxu0 %v506
        %508 = vmatprep.subr.mxu0 0.0
        %509 = vmatpush1.msra.mxu0 0.0
        %510 = vmatprep.subr.mxu0 0.0
        %511 = vmatpush1.msra.mxu0 0.0
        %512 = vmatprep.subr.mxu0 0.0
        %513 = vmatpush1.msra.mxu0 0.0
        %514 = vmatprep.subr.mxu0 0.0
        %515 = vmatpush1.msra.mxu0 0.0
        %516 = vmatprep.subr.mxu0 0.0
        %517 = vmatpush1.msra.mxu0 0.0
        %518 = vmatprep.subr.mxu0 0.0
        %519 = vmatpush1.msra.mxu0 0.0
        %520 = vmatprep.subr.mxu0 0.0
        %521 = vmatpush1.msra.mxu0 0.0
        %522 = vmatprep.subr.mxu0 0.0
        %523 = vmatpush1.msra.mxu0 0.0
        %524 = vmatprep.subr.mxu0 0.0
        %525 = vmatpush1.msra.mxu0 0.0
        %526 = vmatprep.subr.mxu0 0.0
        %527 = vmatpush1.msra.mxu0 0.0
        %528 = vmatprep.subr.mxu0 0.0
        %529 = vmatpush1.msra.mxu0 0.0
        %530 = vmatprep.subr.mxu0 0.0
        %531 = vmatpush1.msra.mxu0 0.0
        %532 = vmatprep.subr.mxu0 0.0
        %533 = vmatpush1.msra.mxu0 0.0
        %534 = vmatprep.subr.mxu0 0.0
        %535 = vmatpush1.msra.mxu0 0.0
        %536 = vmatprep.subr.mxu0 0.0
        %537 = vmatpush1.msra.mxu0 0.0
        %538 = vmatprep.subr.mxu0 0.0
        %539 = vmatpush1.msra.mxu0 0.0
        %540 = vmatprep.subr.mxu0 0.0
        %541 = vmatpush1.msra.mxu0 0.0
        %542 = vmatprep.subr.mxu0 0.0
        %543 = vmatpush1.msra.mxu0 0.0
        %544 = vmatprep.subr.mxu0 0.0
        %545 = vmatpush1.msra.mxu0 0.0
        %546 = vmatprep.subr.mxu0 0.0
        %547 = vmatpush1.msra.mxu0 0.0
        %548 = vmatprep.subr.mxu0 0.0
        %549 = vmatpush1.msra.mxu0 0.0
        %550 = vmatprep.subr.mxu0 0.0
        %551 = vmatpush1.msra.mxu0 0.0
        %552 = vmatprep.subr.mxu0 0.0
        %553 = vmatpush1.msra.mxu0 0.0
        %554 = vmatprep.subr.mxu0 0.0
        %555 = vmatpush1.msra.mxu0 0.0
        %556 = vmatprep.subr.mxu0 0.0
        %557 = vmatpush1.msra.mxu0 0.0
        %558 = vmatprep.subr.mxu0 0.0
        %559 = vmatpush1.msra.mxu0 0.0
        %560 = vmatprep.subr.mxu0 0.0
        %561 = vmatpush1.msra.mxu0 0.0
        %562 = vmatprep.subr.mxu0 0.0
        %563 = vmatpush1.msra.mxu0 0.0
        %564 = vmatprep.subr.mxu0 0.0
        %565 = vmatpush1.msra.mxu0 0.0
        %566 = vmatprep.subr.mxu0 0.0
        %567 = vmatpush1.msra.mxu0 0.0
        %568 = vmatprep.mubr.f32.mxu0 0.0
        %v569 = vand.u32 %v188, 4294901760
        %v570 = vsub.f32 %v188, %v569
        %v571 = vand.u32 %v570, 4294901760
        %572 = vmatmul.mubr.f32.gmra.mrb[0].mxu0 %v571
        %v573 = vpop.f32.mrb[0].mxu0
        %v574 = vadd.f32 %v478, %v573
        %v575 = vpop.f32.mrb[0].mxu0
        %576 = vmatprep.mubr.f32.mxu0 0.0
        %v577 = vand.u32 %v191, 4294901760
        %v578 = vsub.f32 %v191, %v577
        %v579 = vand.u32 %v578, 4294901760
        %580 = vmatmul.mubr.f32.gmra.mrb[0].mxu0 %v579
        %v581 = vpop.f32.mrb[0].mxu0
        %v582 = vadd.f32 %v485, %v581
        %v583 = vpop.f32.mrb[0].mxu0
        %584 = vmatprep.mubr.f32.mxu0 0.0
        %v585 = vand.u32 %v194, 4294901760
        %v586 = vsub.f32 %v194, %v585
        %v587 = vand.u32 %v586, 4294901760
        %588 = vmatmul.mubr.f32.gmra.mrb[0].mxu0 %v587
        %v589 = vpop.f32.mrb[0].mxu0
        %v590 = vadd.f32 %v492, %v589
        %v591 = vpop.f32.mrb[0].mxu0
        %592 = vmatprep.mubr.f32.mxu0 0.0
        %v593 = vand.u32 %v197, 4294901760
        %v594 = vsub.f32 %v197, %v593
        %v595 = vand.u32 %v594, 4294901760
        %596 = vmatmul.mubr.f32.gmra.mrb[0].mxu0 %v595
        %v597 = vpop.f32.mrb[0].mxu0
        %v598 = vadd.f32 %v499, %v597
        %v599 = vpop.f32.mrb[0].mxu0
        %600 = vdwg.mxu0
        %601 = vmatprep.subr.mxu0 0.0
        %v602 = vand.u32 %v184, 4294901760
        %v603 = vsub.f32 %v184, %v602
        %v604 = vand.u32 %v603, 4294901760
        %605 = vmatpush1.msra.mxu0 %v604
        %606 = vmatprep.subr.mxu0 0.0
        %v607 = vand.u32 %v185, 4294901760
        %v608 = vsub.f32 %v185, %v607
        %v609 = vand.u32 %v608, 4294901760
        %610 = vmatpush1.msra.mxu0 %v609
        %611 = vmatprep.subr.mxu0 0.0
        %612 = vmatpush1.msra.mxu0 0.0
        %613 = vmatprep.subr.mxu0 0.0
        %614 = vmatpush1.msra.mxu0 0.0
        %615 = vmatprep.subr.mxu0 0.0
        %616 = vmatpush1.msra.mxu0 0.0
        %617 = vmatprep.subr.mxu0 0.0
        %618 = vmatpush1.msra.mxu0 0.0
        %619 = vmatprep.subr.mxu0 0.0
        %620 = vmatpush1.msra.mxu0 0.0
        %621 = vmatprep.subr.mxu0 0.0
        %622 = vmatpush1.msra.mxu0 0.0
        %623 = vmatprep.subr.mxu0 0.0
        %624 = vmatpush1.msra.mxu0 0.0
        %625 = vmatprep.subr.mxu0 0.0
        %626 = vmatpush1.msra.mxu0 0.0
        %627 = vmatprep.subr.mxu0 0.0
        %628 = vmatpush1.msra.mxu0 0.0
        %629 = vmatprep.subr.mxu0 0.0
        %630 = vmatpush1.msra.mxu0 0.0
        %631 = vmatprep.subr.mxu0 0.0
        %632 = vmatpush1.msra.mxu0 0.0
        %633 = vmatprep.subr.mxu0 0.0
        %634 = vmatpush1.msra.mxu0 0.0
        %635 = vmatprep.subr.mxu0 0.0
        %636 = vmatpush1.msra.mxu0 0.0
        %637 = vmatprep.subr.mxu0 0.0
        %638 = vmatpush1.msra.mxu0 0.0
        %639 = vmatprep.subr.mxu0 0.0
        %640 = vmatpush1.msra.mxu0 0.0
        %641 = vmatprep.subr.mxu0 0.0
        %642 = vmatpush1.msra.mxu0 0.0
        %643 = vmatprep.subr.mxu0 0.0
        %644 = vmatpush1.msra.mxu0 0.0
        %645 = vmatprep.subr.mxu0 0.0
        %646 = vmatpush1.msra.mxu0 0.0
        %647 = vmatprep.subr.mxu0 0.0
        %648 = vmatpush1.msra.mxu0 0.0
        %649 = vmatprep.subr.mxu0 0.0
        %650 = vmatpush1.msra.mxu0 0.0
        %651 = vmatprep.subr.mxu0 0.0
        %652 = vmatpush1.msra.mxu0 0.0
        %653 = vmatprep.subr.mxu0 0.0
        %654 = vmatpush1.msra.mxu0 0.0
        %655 = vmatprep.subr.mxu0 0.0
        %656 = vmatpush1.msra.mxu0 0.0
        %657 = vmatprep.subr.mxu0 0.0
        %658 = vmatpush1.msra.mxu0 0.0
        %659 = vmatprep.subr.mxu0 0.0
        %660 = vmatpush1.msra.mxu0 0.0
        %661 = vmatprep.subr.mxu0 0.0
        %662 = vmatpush1.msra.mxu0 0.0
        %663 = vmatprep.subr.mxu0 0.0
        %664 = vmatpush1.msra.mxu0 0.0
        %665 = vmatprep.subr.mxu0 0.0
        %666 = vmatpush1.msra.mxu0 0.0
        %667 = vmatprep.subr.mxu0 0.0
        %668 = vmatpush1.msra.mxu0 0.0
        %669 = vmatprep.subr.mxu0 0.0
        %670 = vmatpush1.msra.mxu0 0.0
        %671 = vmatprep.mubr.f32.mxu0 0.0
        %v672 = vand.u32 %v188, 4294901760
        %673 = vmatmul.mubr.f32.gmra.mrb[0].mxu0 %v672
        %v674 = vpop.f32.mrb[0].mxu0
        %v675 = vadd.f32 %v574, %v674
        %v676 = vpop.f32.mrb[0].mxu0
        %677 = vmatprep.mubr.f32.mxu0 0.0
        %v678 = vand.u32 %v191, 4294901760
        %679 = vmatmul.mubr.f32.gmra.mrb[0].mxu0 %v678
        %v680 = vpop.f32.mrb[0].mxu0
        %v681 = vadd.f32 %v582, %v680
        %v682 = vpop.f32.mrb[0].mxu0
        %683 = vmatprep.mubr.f32.mxu0 0.0
        %v684 = vand.u32 %v194, 4294901760
        %685 = vmatmul.mubr.f32.gmra.mrb[0].mxu0 %v684
        %v686 = vpop.f32.mrb[0].mxu0
        %v687 = vadd.f32 %v590, %v686
        %v688 = vpop.f32.mrb[0].mxu0
        %689 = vmatprep.mubr.f32.mxu0 0.0
        %v690 = vand.u32 %v197, 4294901760
        %691 = vmatmul.mubr.f32.gmra.mrb[0].mxu0 %v690
        %v692 = vpop.f32.mrb[0].mxu0
        %v693 = vadd.f32 %v598, %v692
        %v694 = vpop.f32.mrb[0].mxu0
        %695 = vdwg.mxu0
        %696 = vmatprep.subr.mxu0 0.0
        %v697 = vand.u32 %v184, 4294901760
        %698 = vmatpush1.msra.mxu0 %v697
        %699 = vmatprep.subr.mxu0 0.0
        %v700 = vand.u32 %v185, 4294901760
        %701 = vmatpush1.msra.mxu0 %v700
        %702 = vmatprep.subr.mxu0 0.0
        %703 = vmatpush1.msra.mxu0 0.0
        %704 = vmatprep.subr.mxu0 0.0
        %705 = vmatpush1.msra.mxu0 0.0
        %706 = vmatprep.subr.mxu0 0.0
        %707 = vmatpush1.msra.mxu0 0.0
        %708 = vmatprep.subr.mxu0 0.0
        %709 = vmatpush1.msra.mxu0 0.0
        %710 = vmatprep.subr.mxu0 0.0
        %711 = vmatpush1.msra.mxu0 0.0
        %712 = vmatprep.subr.mxu0 0.0
        %713 = vmatpush1.msra.mxu0 0.0
        %714 = vmatprep.subr.mxu0 0.0
        %715 = vmatpush1.msra.mxu0 0.0
        %716 = vmatprep.subr.mxu0 0.0
        %717 = vmatpush1.msra.mxu0 0.0
        %718 = vmatprep.subr.mxu0 0.0
        %719 = vmatpush1.msra.mxu0 0.0
        %720 = vmatprep.subr.mxu0 0.0
        %721 = vmatpush1.msra.mxu0 0.0
        %722 = vmatprep.subr.mxu0 0.0
        %723 = vmatpush1.msra.mxu0 0.0
        %724 = vmatprep.subr.mxu0 0.0
        %725 = vmatpush1.msra.mxu0 0.0
        %726 = vmatprep.subr.mxu0 0.0
        %727 = vmatpush1.msra.mxu0 0.0
        %728 = vmatprep.subr.mxu0 0.0
        %729 = vmatpush1.msra.mxu0 0.0
        %730 = vmatprep.subr.mxu0 0.0
        %731 = vmatpush1.msra.mxu0 0.0
        %732 = vmatprep.subr.mxu0 0.0
        %733 = vmatpush1.msra.mxu0 0.0
        %734 = vmatprep.subr.mxu0 0.0
        %735 = vmatpush1.msra.mxu0 0.0
        %736 = vmatprep.subr.mxu0 0.0
        %737 = vmatpush1.msra.mxu0 0.0
        %738 = vmatprep.subr.mxu0 0.0
        %739 = vmatpush1.msra.mxu0 0.0
        %740 = vmatprep.subr.mxu0 0.0
        %741 = vmatpush1.msra.mxu0 0.0
        %742 = vmatprep.subr.mxu0 0.0
        %743 = vmatpush1.msra.mxu0 0.0
        %744 = vmatprep.subr.mxu0 0.0
        %745 = vmatpush1.msra.mxu0 0.0
        %746 = vmatprep.subr.mxu0 0.0
        %747 = vmatpush1.msra.mxu0 0.0
        %748 = vmatprep.subr.mxu0 0.0
        %749 = vmatpush1.msra.mxu0 0.0
        %750 = vmatprep.subr.mxu0 0.0
        %751 = vmatpush1.msra.mxu0 0.0
        %752 = vmatprep.subr.mxu0 0.0
        %753 = vmatpush1.msra.mxu0 0.0
        %754 = vmatprep.subr.mxu0 0.0
        %755 = vmatpush1.msra.mxu0 0.0
        %756 = vmatprep.subr.mxu0 0.0
        %757 = vmatpush1.msra.mxu0 0.0
        %758 = vmatprep.subr.mxu0 0.0
        %759 = vmatpush1.msra.mxu0 0.0
        %760 = vmatprep.subr.mxu0 0.0
        %761 = vmatpush1.msra.mxu0 0.0
        %762 = vmatprep.mubr.f32.mxu0 0.0
        %v763 = vand.u32 %v188, 4294901760
        %764 = vmatmul.mubr.f32.gmra.mrb[0].mxu0 %v763
        %v765 = vpop.f32.mrb[0].mxu0
        %v766 = vadd.f32 %v675, %v765
        %v767 = vpop.f32.mrb[0].mxu0
        %768 = vmatprep.mubr.f32.mxu0 0.0
        %v769 = vand.u32 %v191, 4294901760
        %770 = vmatmul.mubr.f32.gmra.mrb[0].mxu0 %v769
        %v771 = vpop.f32.mrb[0].mxu0
        %v772 = vadd.f32 %v681, %v771
        %v773 = vpop.f32.mrb[0].mxu0
        %774 = vmatprep.mubr.f32.mxu0 0.0
        %v775 = vand.u32 %v194, 4294901760
        %776 = vmatmul.mubr.f32.gmra.mrb[0].mxu0 %v775
        %v777 = vpop.f32.mrb[0].mxu0
        %v778 = vadd.f32 %v687, %v777
        %v779 = vpop.f32.mrb[0].mxu0
        %780 = vmatprep.mubr.f32.mxu0 0.0
        %v781 = vand.u32 %v197, 4294901760
        %782 = vmatmul.mubr.f32.gmra.mrb[0].mxu0 %v781
        %v783 = vpop.f32.mrb[0].mxu0
        %v784 = vadd.f32 %v693, %v783
        %v785 = vpop.f32.mrb[0].mxu0
        %786 = vdwg.mxu0
        %vm787 = vcmask 64512
        %788 = vst.msk [vmem:[%s163] sm:$0xff] %vm787, %v766
        %789 = vst.msk [vmem:[%s163 + $0x8] sm:$0xff] %vm787, %v772
        %790 = vst.msk [vmem:[%s163 + $0x10] sm:$0xff] %vm787, %v778
        %791 = vst.msk [vmem:[%s163 + $0x18] sm:$0xff] %vm787, %v784
        %796 = vrot.lane.b32.xlu0 %v766, 120
        %v797 = vpop.permute.xlu0 %796
        %798 = vrot.lane.b32.xlu0 %v772, 120
        %v799 = vpop.permute.xlu0 %798
        %800 = vrot.lane.b32.xlu0 %v778, 120
        %v801 = vpop.permute.xlu0 %800
        %802 = vrot.lane.b32.xlu0 %v784, 120
        %v803 = vpop.permute.xlu0 %802
        %s808 = scalar_lea.vmem %s163, 32
        %809 = vst.msk [vmem:[%s808] sm:$0xff] %vm787, %v797
        %810 = vst.msk [vmem:[%s808 + $0x8] sm:$0xff] %vm787, %v799
        %811 = vst.msk [vmem:[%s808 + $0x10] sm:$0xff] %vm787, %v801
        %812 = vst.msk [vmem:[%s808 + $0x18] sm:$0xff] %vm787, %v803
        %813 = vrot.lane.b32.xlu0 %v165, 112
        %v814 = vpop.permute.xlu0 %813
        %815 = vrot.lane.b32.xlu0 %v166, 112
        %v816 = vpop.permute.xlu0 %815
        %817 = vrot.lane.b32.xlu0 %v167, 112
        %v818 = vpop.permute.xlu0 %817
        %819 = vrot.lane.b32.xlu0 %v168, 112
        %v820 = vpop.permute.xlu0 %819
        %v821 = vsel %vm186, %v814, 0
        %v823 = vsel %vm186, %v816, 0
        %v825 = vsel %vm186, %v818, 0
        %v827 = vsel %vm186, %v820, 0
        %829 = vmatprep.subr.mxu0 0.0
        %v830 = vand.u32 %v184, 4294901760
        %831 = vmatpush1.msra.mxu0 %v830
        %832 = vmatprep.subr.mxu0 0.0
        %v833 = vand.u32 %v185, 4294901760
        %834 = vmatpush1.msra.mxu0 %v833
        %835 = vmatprep.subr.mxu0 0.0
        %836 = vmatpush1.msra.mxu0 0.0
        %837 = vmatprep.subr.mxu0 0.0
        %838 = vmatpush1.msra.mxu0 0.0
        %839 = vmatprep.subr.mxu0 0.0
        %840 = vmatpush1.msra.mxu0 0.0
        %841 = vmatprep.subr.mxu0 0.0
        %842 = vmatpush1.msra.mxu0 0.0
        %843 = vmatprep.subr.mxu0 0.0
        %844 = vmatpush1.msra.mxu0 0.0
        %845 = vmatprep.subr.mxu0 0.0
        %846 = vmatpush1.msra.mxu0 0.0
        %847 = vmatprep.subr.mxu0 0.0
        %848 = vmatpush1.msra.mxu0 0.0
        %849 = vmatprep.subr.mxu0 0.0
        %850 = vmatpush1.msra.mxu0 0.0
        %851 = vmatprep.subr.mxu0 0.0
        %852 = vmatpush1.msra.mxu0 0.0
        %853 = vmatprep.subr.mxu0 0.0
        %854 = vmatpush1.msra.mxu0 0.0
        %855 = vmatprep.subr.mxu0 0.0
        %856 = vmatpush1.msra.mxu0 0.0
        %857 = vmatprep.subr.mxu0 0.0
        %858 = vmatpush1.msra.mxu0 0.0
        %859 = vmatprep.subr.mxu0 0.0
        %860 = vmatpush1.msra.mxu0 0.0
        %861 = vmatprep.subr.mxu0 0.0
        %862 = vmatpush1.msra.mxu0 0.0
        %863 = vmatprep.subr.mxu0 0.0
        %864 = vmatpush1.msra.mxu0 0.0
        %865 = vmatprep.subr.mxu0 0.0
        %866 = vmatpush1.msra.mxu0 0.0
        %867 = vmatprep.subr.mxu0 0.0
        %868 = vmatpush1.msra.mxu0 0.0
        %869 = vmatprep.subr.mxu0 0.0
        %870 = vmatpush1.msra.mxu0 0.0
        %871 = vmatprep.subr.mxu0 0.0
        %872 = vmatpush1.msra.mxu0 0.0
        %873 = vmatprep.subr.mxu0 0.0
        %874 = vmatpush1.msra.mxu0 0.0
        %875 = vmatprep.subr.mxu0 0.0
        %876 = vmatpush1.msra.mxu0 0.0
        %877 = vmatprep.subr.mxu0 0.0
        %878 = vmatpush1.msra.mxu0 0.0
        %879 = vmatprep.subr.mxu0 0.0
        %880 = vmatpush1.msra.mxu0 0.0
        %881 = vmatprep.subr.mxu0 0.0
        %882 = vmatpush1.msra.mxu0 0.0
        %883 = vmatprep.subr.mxu0 0.0
        %884 = vmatpush1.msra.mxu0 0.0
        %885 = vmatprep.subr.mxu0 0.0
        %886 = vmatpush1.msra.mxu0 0.0
        %887 = vmatprep.subr.mxu0 0.0
        %888 = vmatpush1.msra.mxu0 0.0
        %889 = vmatprep.subr.mxu0 0.0
        %890 = vmatpush1.msra.mxu0 0.0
        %891 = vmatprep.subr.mxu0 0.0
        %892 = vmatpush1.msra.mxu0 0.0
        %893 = vmatprep.subr.mxu0 0.0
        %894 = vmatpush1.msra.mxu0 0.0
        %895 = vmatprep.mubr.f32.mxu0 0.0
        %v896 = vand.u32 %v821, 4294901760
        %v897 = vsub.f32 %v821, %v896
        %v898 = vand.u32 %v897, 4294901760
        %v899 = vsub.f32 %v897, %v898
        %v900 = vand.u32 %v899, 4294901760
        %901 = vmatmul.mubr.f32.gmra.mrb[0].mxu0 %v900
        %v902 = vpop.f32.mrb[0].mxu0
        %v903 = vadd.f32 0.0, %v902
        %v904 = vpop.f32.mrb[0].mxu0
        %905 = vmatprep.mubr.f32.mxu0 0.0
        %v906 = vand.u32 %v823, 4294901760
        %v907 = vsub.f32 %v823, %v906
        %v908 = vand.u32 %v907, 4294901760
        %v909 = vsub.f32 %v907, %v908
        %v910 = vand.u32 %v909, 4294901760
        %911 = vmatmul.mubr.f32.gmra.mrb[0].mxu0 %v910
        %v912 = vpop.f32.mrb[0].mxu0
        %v913 = vadd.f32 0.0, %v912
        %v914 = vpop.f32.mrb[0].mxu0
        %915 = vmatprep.mubr.f32.mxu0 0.0
        %v916 = vand.u32 %v825, 4294901760
        %v917 = vsub.f32 %v825, %v916
        %v918 = vand.u32 %v917, 4294901760
        %v919 = vsub.f32 %v917, %v918
        %v920 = vand.u32 %v919, 4294901760
        %921 = vmatmul.mubr.f32.gmra.mrb[0].mxu0 %v920
        %v922 = vpop.f32.mrb[0].mxu0
        %v923 = vadd.f32 0.0, %v922
        %v924 = vpop.f32.mrb[0].mxu0
        %925 = vmatprep.mubr.f32.mxu0 0.0
        %v926 = vand.u32 %v827, 4294901760
        %v927 = vsub.f32 %v827, %v926
        %v928 = vand.u32 %v927, 4294901760
        %v929 = vsub.f32 %v927, %v928
        %v930 = vand.u32 %v929, 4294901760
        %931 = vmatmul.mubr.f32.gmra.mrb[0].mxu0 %v930
        %v932 = vpop.f32.mrb[0].mxu0
        %v933 = vadd.f32 0.0, %v932
        %v934 = vpop.f32.mrb[0].mxu0
        %935 = vdwg.mxu0
        %936 = vmatprep.subr.mxu0 0.0
        %v937 = vand.u32 %v184, 4294901760
        %v938 = vsub.f32 %v184, %v937
        %v939 = vand.u32 %v938, 4294901760
        %v940 = vsub.f32 %v938, %v939
        %v941 = vand.u32 %v940, 4294901760
        %942 = vmatpush1.msra.mxu0 %v941
        %943 = vmatprep.subr.mxu0 0.0
        %v944 = vand.u32 %v185, 4294901760
        %v945 = vsub.f32 %v185, %v944
        %v946 = vand.u32 %v945, 4294901760
        %v947 = vsub.f32 %v945, %v946
        %v948 = vand.u32 %v947, 4294901760
        %949 = vmatpush1.msra.mxu0 %v948
        %950 = vmatprep.subr.mxu0 0.0
        %951 = vmatpush1.msra.mxu0 0.0
        %952 = vmatprep.subr.mxu0 0.0
        %953 = vmatpush1.msra.mxu0 0.0
        %954 = vmatprep.subr.mxu0 0.0
        %955 = vmatpush1.msra.mxu0 0.0
        %956 = vmatprep.subr.mxu0 0.0
        %957 = vmatpush1.msra.mxu0 0.0
        %958 = vmatprep.subr.mxu0 0.0
        %959 = vmatpush1.msra.mxu0 0.0
        %960 = vmatprep.subr.mxu0 0.0
        %961 = vmatpush1.msra.mxu0 0.0
        %962 = vmatprep.subr.mxu0 0.0
        %963 = vmatpush1.msra.mxu0 0.0
        %964 = vmatprep.subr.mxu0 0.0
        %965 = vmatpush1.msra.mxu0 0.0
        %966 = vmatprep.subr.mxu0 0.0
        %967 = vmatpush1.msra.mxu0 0.0
        %968 = vmatprep.subr.mxu0 0.0
        %969 = vmatpush1.msra.mxu0 0.0
        %970 = vmatprep.subr.mxu0 0.0
        %971 = vmatpush1.msra.mxu0 0.0
        %972 = vmatprep.subr.mxu0 0.0
        %973 = vmatpush1.msra.mxu0 0.0
        %974 = vmatprep.subr.mxu0 0.0
        %975 = vmatpush1.msra.mxu0 0.0
        %976 = vmatprep.subr.mxu0 0.0
        %977 = vmatpush1.msra.mxu0 0.0
        %978 = vmatprep.subr.mxu0 0.0
        %979 = vmatpush1.msra.mxu0 0.0
        %980 = vmatprep.subr.mxu0 0.0
        %981 = vmatpush1.msra.mxu0 0.0
        %982 = vmatprep.subr.mxu0 0.0
        %983 = vmatpush1.msra.mxu0 0.0
        %984 = vmatprep.subr.mxu0 0.0
        %985 = vmatpush1.msra.mxu0 0.0
        %986 = vmatprep.subr.mxu0 0.0
        %987 = vmatpush1.msra.mxu0 0.0
        %988 = vmatprep.subr.mxu0 0.0
        %989 = vmatpush1.msra.mxu0 0.0
        %990 = vmatprep.subr.mxu0 0.0
        %991 = vmatpush1.msra.mxu0 0.0
        %992 = vmatprep.subr.mxu0 0.0
        %993 = vmatpush1.msra.mxu0 0.0
        %994 = vmatprep.subr.mxu0 0.0
        %995 = vmatpush1.msra.mxu0 0.0
        %996 = vmatprep.subr.mxu0 0.0
        %997 = vmatpush1.msra.mxu0 0.0
        %998 = vmatprep.subr.mxu0 0.0
        %999 = vmatpush1.msra.mxu0 0.0
        %1000 = vmatprep.subr.mxu0 0.0
        %1001 = vmatpush1.msra.mxu0 0.0
        %1002 = vmatprep.subr.mxu0 0.0
        %1003 = vmatpush1.msra.mxu0 0.0
        %1004 = vmatprep.subr.mxu0 0.0
        %1005 = vmatpush1.msra.mxu0 0.0
        %1006 = vmatprep.subr.mxu0 0.0
        %1007 = vmatpush1.msra.mxu0 0.0
        %1008 = vmatprep.subr.mxu0 0.0
        %1009 = vmatpush1.msra.mxu0 0.0
        %1010 = vmatprep.mubr.f32.mxu0 0.0
        %v1011 = vand.u32 %v821, 4294901760
        %1012 = vmatmul.mubr.f32.gmra.mrb[0].mxu0 %v1011
        %v1013 = vpop.f32.mrb[0].mxu0
        %v1014 = vadd.f32 %v903, %v1013
        %v1015 = vpop.f32.mrb[0].mxu0
        %1016 = vmatprep.mubr.f32.mxu0 0.0
        %v1017 = vand.u32 %v823, 4294901760
        %1018 = vmatmul.mubr.f32.gmra.mrb[0].mxu0 %v1017
        %v1019 = vpop.f32.mrb[0].mxu0
        %v1020 = vadd.f32 %v913, %v1019
        %v1021 = vpop.f32.mrb[0].mxu0
        %1022 = vmatprep.mubr.f32.mxu0 0.0
        %v1023 = vand.u32 %v825, 4294901760
        %1024 = vmatmul.mubr.f32.gmra.mrb[0].mxu0 %v1023
        %v1025 = vpop.f32.mrb[0].mxu0
        %v1026 = vadd.f32 %v923, %v1025
        %v1027 = vpop.f32.mrb[0].mxu0
        %1028 = vmatprep.mubr.f32.mxu0 0.0
        %v1029 = vand.u32 %v827, 4294901760
        %1030 = vmatmul.mubr.f32.gmra.mrb[0].mxu0 %v1029
        %v1031 = vpop.f32.mrb[0].mxu0
        %v1032 = vadd.f32 %v933, %v1031
        %v1033 = vpop.f32.mrb[0].mxu0
        %1034 = vdwg.mxu0
        %1035 = vmatprep.subr.mxu0 0.0
        %v1036 = vand.u32 %v184, 4294901760
        %v1037 = vsub.f32 %v184, %v1036
        %1038 = vmatpush1.msra.mxu0 %v1037
        %1039 = vmatprep.subr.mxu0 0.0
        %v1040 = vand.u32 %v185, 4294901760
        %v1041 = vsub.f32 %v185, %v1040
        %1042 = vmatpush1.msra.mxu0 %v1041
        %1043 = vmatprep.subr.mxu0 0.0
        %1044 = vmatpush1.msra.mxu0 0.0
        %1045 = vmatprep.subr.mxu0 0.0
        %1046 = vmatpush1.msra.mxu0 0.0
        %1047 = vmatprep.subr.mxu0 0.0
        %1048 = vmatpush1.msra.mxu0 0.0
        %1049 = vmatprep.subr.mxu0 0.0
        %1050 = vmatpush1.msra.mxu0 0.0
        %1051 = vmatprep.subr.mxu0 0.0
        %1052 = vmatpush1.msra.mxu0 0.0
        %1053 = vmatprep.subr.mxu0 0.0
        %1054 = vmatpush1.msra.mxu0 0.0
        %1055 = vmatprep.subr.mxu0 0.0
        %1056 = vmatpush1.msra.mxu0 0.0
        %1057 = vmatprep.subr.mxu0 0.0
        %1058 = vmatpush1.msra.mxu0 0.0
        %1059 = vmatprep.subr.mxu0 0.0
        %1060 = vmatpush1.msra.mxu0 0.0
        %1061 = vmatprep.subr.mxu0 0.0
        %1062 = vmatpush1.msra.mxu0 0.0
        %1063 = vmatprep.subr.mxu0 0.0
        %1064 = vmatpush1.msra.mxu0 0.0
        %1065 = vmatprep.subr.mxu0 0.0
        %1066 = vmatpush1.msra.mxu0 0.0
        %1067 = vmatprep.subr.mxu0 0.0
        %1068 = vmatpush1.msra.mxu0 0.0
        %1069 = vmatprep.subr.mxu0 0.0
        %1070 = vmatpush1.msra.mxu0 0.0
        %1071 = vmatprep.subr.mxu0 0.0
        %1072 = vmatpush1.msra.mxu0 0.0
        %1073 = vmatprep.subr.mxu0 0.0
        %1074 = vmatpush1.msra.mxu0 0.0
        %1075 = vmatprep.subr.mxu0 0.0
        %1076 = vmatpush1.msra.mxu0 0.0
        %1077 = vmatprep.subr.mxu0 0.0
        %1078 = vmatpush1.msra.mxu0 0.0
        %1079 = vmatprep.subr.mxu0 0.0
        %1080 = vmatpush1.msra.mxu0 0.0
        %1081 = vmatprep.subr.mxu0 0.0
        %1082 = vmatpush1.msra.mxu0 0.0
        %1083 = vmatprep.subr.mxu0 0.0
        %1084 = vmatpush1.msra.mxu0 0.0
        %1085 = vmatprep.subr.mxu0 0.0
        %1086 = vmatpush1.msra.mxu0 0.0
        %1087 = vmatprep.subr.mxu0 0.0
        %1088 = vmatpush1.msra.mxu0 0.0
        %1089 = vmatprep.subr.mxu0 0.0
        %1090 = vmatpush1.msra.mxu0 0.0
        %1091 = vmatprep.subr.mxu0 0.0
        %1092 = vmatpush1.msra.mxu0 0.0
        %1093 = vmatprep.subr.mxu0 0.0
        %1094 = vmatpush1.msra.mxu0 0.0
        %1095 = vmatprep.subr.mxu0 0.0
        %1096 = vmatpush1.msra.mxu0 0.0
        %1097 = vmatprep.subr.mxu0 0.0
        %1098 = vmatpush1.msra.mxu0 0.0
        %1099 = vmatprep.subr.mxu0 0.0
        %1100 = vmatpush1.msra.mxu0 0.0
        %1101 = vmatprep.subr.mxu0 0.0
        %1102 = vmatpush1.msra.mxu0 0.0
        %1103 = vmatprep.mubr.f32.mxu0 0.0
        %v1104 = vand.u32 %v821, 4294901760
        %v1105 = vsub.f32 %v821, %v1104
        %1106 = vmatmul.mubr.f32.gmra.mrb[0].mxu0 %v1105
        %v1107 = vpop.f32.mrb[0].mxu0
        %v1108 = vadd.f32 %v1014, %v1107
        %v1109 = vpop.f32.mrb[0].mxu0
        %1110 = vmatprep.mubr.f32.mxu0 0.0
        %v1111 = vand.u32 %v823, 4294901760
        %v1112 = vsub.f32 %v823, %v1111
        %1113 = vmatmul.mubr.f32.gmra.mrb[0].mxu0 %v1112
        %v1114 = vpop.f32.mrb[0].mxu0
        %v1115 = vadd.f32 %v1020, %v1114
        %v1116 = vpop.f32.mrb[0].mxu0
        %1117 = vmatprep.mubr.f32.mxu0 0.0
        %v1118 = vand.u32 %v825, 4294901760
        %v1119 = vsub.f32 %v825, %v1118
        %1120 = vmatmul.mubr.f32.gmra.mrb[0].mxu0 %v1119
        %v1121 = vpop.f32.mrb[0].mxu0
        %v1122 = vadd.f32 %v1026, %v1121
        %v1123 = vpop.f32.mrb[0].mxu0
        %1124 = vmatprep.mubr.f32.mxu0 0.0
        %v1125 = vand.u32 %v827, 4294901760
        %v1126 = vsub.f32 %v827, %v1125
        %1127 = vmatmul.mubr.f32.gmra.mrb[0].mxu0 %v1126
        %v1128 = vpop.f32.mrb[0].mxu0
        %v1129 = vadd.f32 %v1032, %v1128
        %v1130 = vpop.f32.mrb[0].mxu0
        %1131 = vdwg.mxu0
        %1132 = vmatprep.subr.mxu0 0.0
        %v1133 = vand.u32 %v184, 4294901760
        %1134 = vmatpush1.msra.mxu0 %v1133
        %1135 = vmatprep.subr.mxu0 0.0
        %v1136 = vand.u32 %v185, 4294901760
        %1137 = vmatpush1.msra.mxu0 %v1136
        %1138 = vmatprep.subr.mxu0 0.0
        %1139 = vmatpush1.msra.mxu0 0.0
        %1140 = vmatprep.subr.mxu0 0.0
        %1141 = vmatpush1.msra.mxu0 0.0
        %1142 = vmatprep.subr.mxu0 0.0
        %1143 = vmatpush1.msra.mxu0 0.0
        %1144 = vmatprep.subr.mxu0 0.0
        %1145 = vmatpush1.msra.mxu0 0.0
        %1146 = vmatprep.subr.mxu0 0.0
        %1147 = vmatpush1.msra.mxu0 0.0
        %1148 = vmatprep.subr.mxu0 0.0
        %1149 = vmatpush1.msra.mxu0 0.0
        %1150 = vmatprep.subr.mxu0 0.0
        %1151 = vmatpush1.msra.mxu0 0.0
        %1152 = vmatprep.subr.mxu0 0.0
        %1153 = vmatpush1.msra.mxu0 0.0
        %1154 = vmatprep.subr.mxu0 0.0
        %1155 = vmatpush1.msra.mxu0 0.0
        %1156 = vmatprep.subr.mxu0 0.0
        %1157 = vmatpush1.msra.mxu0 0.0
        %1158 = vmatprep.subr.mxu0 0.0
        %1159 = vmatpush1.msra.mxu0 0.0
        %1160 = vmatprep.subr.mxu0 0.0
        %1161 = vmatpush1.msra.mxu0 0.0
        %1162 = vmatprep.subr.mxu0 0.0
        %1163 = vmatpush1.msra.mxu0 0.0
        %1164 = vmatprep.subr.mxu0 0.0
        %1165 = vmatpush1.msra.mxu0 0.0
        %1166 = vmatprep.subr.mxu0 0.0
        %1167 = vmatpush1.msra.mxu0 0.0
        %1168 = vmatprep.subr.mxu0 0.0
        %1169 = vmatpush1.msra.mxu0 0.0
        %1170 = vmatprep.subr.mxu0 0.0
        %1171 = vmatpush1.msra.mxu0 0.0
        %1172 = vmatprep.subr.mxu0 0.0
        %1173 = vmatpush1.msra.mxu0 0.0
        %1174 = vmatprep.subr.mxu0 0.0
        %1175 = vmatpush1.msra.mxu0 0.0
        %1176 = vmatprep.subr.mxu0 0.0
        %1177 = vmatpush1.msra.mxu0 0.0
        %1178 = vmatprep.subr.mxu0 0.0
        %1179 = vmatpush1.msra.mxu0 0.0
        %1180 = vmatprep.subr.mxu0 0.0
        %1181 = vmatpush1.msra.mxu0 0.0
        %1182 = vmatprep.subr.mxu0 0.0
        %1183 = vmatpush1.msra.mxu0 0.0
        %1184 = vmatprep.subr.mxu0 0.0
        %1185 = vmatpush1.msra.mxu0 0.0
        %1186 = vmatprep.subr.mxu0 0.0
        %1187 = vmatpush1.msra.mxu0 0.0
        %1188 = vmatprep.subr.mxu0 0.0
        %1189 = vmatpush1.msra.mxu0 0.0
        %1190 = vmatprep.subr.mxu0 0.0
        %1191 = vmatpush1.msra.mxu0 0.0
        %1192 = vmatprep.subr.mxu0 0.0
        %1193 = vmatpush1.msra.mxu0 0.0
        %1194 = vmatprep.subr.mxu0 0.0
        %1195 = vmatpush1.msra.mxu0 0.0
        %1196 = vmatprep.subr.mxu0 0.0
        %1197 = vmatpush1.msra.mxu0 0.0
        %1198 = vmatprep.mubr.f32.mxu0 0.0
        %v1199 = vand.u32 %v821, 4294901760
        %v1200 = vsub.f32 %v821, %v1199
        %v1201 = vand.u32 %v1200, 4294901760
        %1202 = vmatmul.mubr.f32.gmra.mrb[0].mxu0 %v1201
        %v1203 = vpop.f32.mrb[0].mxu0
        %v1204 = vadd.f32 %v1108, %v1203
        %v1205 = vpop.f32.mrb[0].mxu0
        %1206 = vmatprep.mubr.f32.mxu0 0.0
        %v1207 = vand.u32 %v823, 4294901760
        %v1208 = vsub.f32 %v823, %v1207
        %v1209 = vand.u32 %v1208, 4294901760
        %1210 = vmatmul.mubr.f32.gmra.mrb[0].mxu0 %v1209
        %v1211 = vpop.f32.mrb[0].mxu0
        %v1212 = vadd.f32 %v1115, %v1211
        %v1213 = vpop.f32.mrb[0].mxu0
        %1214 = vmatprep.mubr.f32.mxu0 0.0
        %v1215 = vand.u32 %v825, 4294901760
        %v1216 = vsub.f32 %v825, %v1215
        %v1217 = vand.u32 %v1216, 4294901760
        %1218 = vmatmul.mubr.f32.gmra.mrb[0].mxu0 %v1217
        %v1219 = vpop.f32.mrb[0].mxu0
        %v1220 = vadd.f32 %v1122, %v1219
        %v1221 = vpop.f32.mrb[0].mxu0
        %1222 = vmatprep.mubr.f32.mxu0 0.0
        %v1223 = vand.u32 %v827, 4294901760
        %v1224 = vsub.f32 %v827, %v1223
        %v1225 = vand.u32 %v1224, 4294901760
        %1226 = vmatmul.mubr.f32.gmra.mrb[0].mxu0 %v1225
        %v1227 = vpop.f32.mrb[0].mxu0
        %v1228 = vadd.f32 %v1129, %v1227
        %v1229 = vpop.f32.mrb[0].mxu0
        %1230 = vdwg.mxu0
        %1231 = vmatprep.subr.mxu0 0.0
        %v1232 = vand.u32 %v184, 4294901760
        %v1233 = vsub.f32 %v184, %v1232
        %v1234 = vand.u32 %v1233, 4294901760
        %1235 = vmatpush1.msra.mxu0 %v1234
        %1236 = vmatprep.subr.mxu0 0.0
        %v1237 = vand.u32 %v185, 4294901760
        %v1238 = vsub.f32 %v185, %v1237
        %v1239 = vand.u32 %v1238, 4294901760
        %1240 = vmatpush1.msra.mxu0 %v1239
        %1241 = vmatprep.subr.mxu0 0.0
        %1242 = vmatpush1.msra.mxu0 0.0
        %1243 = vmatprep.subr.mxu0 0.0
        %1244 = vmatpush1.msra.mxu0 0.0
        %1245 = vmatprep.subr.mxu0 0.0
        %1246 = vmatpush1.msra.mxu0 0.0
        %1247 = vmatprep.subr.mxu0 0.0
        %1248 = vmatpush1.msra.mxu0 0.0
        %1249 = vmatprep.subr.mxu0 0.0
        %1250 = vmatpush1.msra.mxu0 0.0
        %1251 = vmatprep.subr.mxu0 0.0
        %1252 = vmatpush1.msra.mxu0 0.0
        %1253 = vmatprep.subr.mxu0 0.0
        %1254 = vmatpush1.msra.mxu0 0.0
        %1255 = vmatprep.subr.mxu0 0.0
        %1256 = vmatpush1.msra.mxu0 0.0
        %1257 = vmatprep.subr.mxu0 0.0
        %1258 = vmatpush1.msra.mxu0 0.0
        %1259 = vmatprep.subr.mxu0 0.0
        %1260 = vmatpush1.msra.mxu0 0.0
        %1261 = vmatprep.subr.mxu0 0.0
        %1262 = vmatpush1.msra.mxu0 0.0
        %1263 = vmatprep.subr.mxu0 0.0
        %1264 = vmatpush1.msra.mxu0 0.0
        %1265 = vmatprep.subr.mxu0 0.0
        %1266 = vmatpush1.msra.mxu0 0.0
        %1267 = vmatprep.subr.mxu0 0.0
        %1268 = vmatpush1.msra.mxu0 0.0
        %1269 = vmatprep.subr.mxu0 0.0
        %1270 = vmatpush1.msra.mxu0 0.0
        %1271 = vmatprep.subr.mxu0 0.0
        %1272 = vmatpush1.msra.mxu0 0.0
        %1273 = vmatprep.subr.mxu0 0.0
        %1274 = vmatpush1.msra.mxu0 0.0
        %1275 = vmatprep.subr.mxu0 0.0
        %1276 = vmatpush1.msra.mxu0 0.0
        %1277 = vmatprep.subr.mxu0 0.0
        %1278 = vmatpush1.msra.mxu0 0.0
        %1279 = vmatprep.subr.mxu0 0.0
        %1280 = vmatpush1.msra.mxu0 0.0
        %1281 = vmatprep.subr.mxu0 0.0
        %1282 = vmatpush1.msra.mxu0 0.0
        %1283 = vmatprep.subr.mxu0 0.0
        %1284 = vmatpush1.msra.mxu0 0.0
        %1285 = vmatprep.subr.mxu0 0.0
        %1286 = vmatpush1.msra.mxu0 0.0
        %1287 = vmatprep.subr.mxu0 0.0
        %1288 = vmatpush1.msra.mxu0 0.0
        %1289 = vmatprep.subr.mxu0 0.0
        %1290 = vmatpush1.msra.mxu0 0.0
        %1291 = vmatprep.subr.mxu0 0.0
        %1292 = vmatpush1.msra.mxu0 0.0
        %1293 = vmatprep.subr.mxu0 0.0
        %1294 = vmatpush1.msra.mxu0 0.0
        %1295 = vmatprep.subr.mxu0 0.0
        %1296 = vmatpush1.msra.mxu0 0.0
        %1297 = vmatprep.subr.mxu0 0.0
        %1298 = vmatpush1.msra.mxu0 0.0
        %1299 = vmatprep.subr.mxu0 0.0
        %1300 = vmatpush1.msra.mxu0 0.0
        %1301 = vmatprep.mubr.f32.mxu0 0.0
        %v1302 = vand.u32 %v821, 4294901760
        %1303 = vmatmul.mubr.f32.gmra.mrb[0].mxu0 %v1302
        %v1304 = vpop.f32.mrb[0].mxu0
        %v1305 = vadd.f32 %v1204, %v1304
        %v1306 = vpop.f32.mrb[0].mxu0
        %1307 = vmatprep.mubr.f32.mxu0 0.0
        %v1308 = vand.u32 %v823, 4294901760
        %1309 = vmatmul.mubr.f32.gmra.mrb[0].mxu0 %v1308
        %v1310 = vpop.f32.mrb[0].mxu0
        %v1311 = vadd.f32 %v1212, %v1310
        %v1312 = vpop.f32.mrb[0].mxu0
        %1313 = vmatprep.mubr.f32.mxu0 0.0
        %v1314 = vand.u32 %v825, 4294901760
        %1315 = vmatmul.mubr.f32.gmra.mrb[0].mxu0 %v1314
        %v1316 = vpop.f32.mrb[0].mxu0
        %v1317 = vadd.f32 %v1220, %v1316
        %v1318 = vpop.f32.mrb[0].mxu0
        %1319 = vmatprep.mubr.f32.mxu0 0.0
        %v1320 = vand.u32 %v827, 4294901760
        %1321 = vmatmul.mubr.f32.gmra.mrb[0].mxu0 %v1320
        %v1322 = vpop.f32.mrb[0].mxu0
        %v1323 = vadd.f32 %v1228, %v1322
        %v1324 = vpop.f32.mrb[0].mxu0
        %1325 = vdwg.mxu0
        %1326 = vmatprep.subr.mxu0 0.0
        %v1327 = vand.u32 %v184, 4294901760
        %1328 = vmatpush1.msra.mxu0 %v1327
        %1329 = vmatprep.subr.mxu0 0.0
        %v1330 = vand.u32 %v185, 4294901760
        %1331 = vmatpush1.msra.mxu0 %v1330
        %1332 = vmatprep.subr.mxu0 0.0
        %1333 = vmatpush1.msra.mxu0 0.0
        %1334 = vmatprep.subr.mxu0 0.0
        %1335 = vmatpush1.msra.mxu0 0.0
        %1336 = vmatprep.subr.mxu0 0.0
        %1337 = vmatpush1.msra.mxu0 0.0
        %1338 = vmatprep.subr.mxu0 0.0
        %1339 = vmatpush1.msra.mxu0 0.0
        %1340 = vmatprep.subr.mxu0 0.0
        %1341 = vmatpush1.msra.mxu0 0.0
        %1342 = vmatprep.subr.mxu0 0.0
        %1343 = vmatpush1.msra.mxu0 0.0
        %1344 = vmatprep.subr.mxu0 0.0
        %1345 = vmatpush1.msra.mxu0 0.0
        %1346 = vmatprep.subr.mxu0 0.0
        %1347 = vmatpush1.msra.mxu0 0.0
        %1348 = vmatprep.subr.mxu0 0.0
        %1349 = vmatpush1.msra.mxu0 0.0
        %1350 = vmatprep.subr.mxu0 0.0
        %1351 = vmatpush1.msra.mxu0 0.0
        %1352 = vmatprep.subr.mxu0 0.0
        %1353 = vmatpush1.msra.mxu0 0.0
        %1354 = vmatprep.subr.mxu0 0.0
        %1355 = vmatpush1.msra.mxu0 0.0
        %1356 = vmatprep.subr.mxu0 0.0
        %1357 = vmatpush1.msra.mxu0 0.0
        %1358 = vmatprep.subr.mxu0 0.0
        %1359 = vmatpush1.msra.mxu0 0.0
        %1360 = vmatprep.subr.mxu0 0.0
        %1361 = vmatpush1.msra.mxu0 0.0
        %1362 = vmatprep.subr.mxu0 0.0
        %1363 = vmatpush1.msra.mxu0 0.0
        %1364 = vmatprep.subr.mxu0 0.0
        %1365 = vmatpush1.msra.mxu0 0.0
        %1366 = vmatprep.subr.mxu0 0.0
        %1367 = vmatpush1.msra.mxu0 0.0
        %1368 = vmatprep.subr.mxu0 0.0
        %1369 = vmatpush1.msra.mxu0 0.0
        %1370 = vmatprep.subr.mxu0 0.0
        %1371 = vmatpush1.msra.mxu0 0.0
        %1372 = vmatprep.subr.mxu0 0.0
        %1373 = vmatpush1.msra.mxu0 0.0
        %1374 = vmatprep.subr.mxu0 0.0
        %1375 = vmatpush1.msra.mxu0 0.0
        %1376 = vmatprep.subr.mxu0 0.0
        %1377 = vmatpush1.msra.mxu0 0.0
        %1378 = vmatprep.subr.mxu0 0.0
        %1379 = vmatpush1.msra.mxu0 0.0
        %1380 = vmatprep.subr.mxu0 0.0
        %1381 = vmatpush1.msra.mxu0 0.0
        %1382 = vmatprep.subr.mxu0 0.0
        %1383 = vmatpush1.msra.mxu0 0.0
        %1384 = vmatprep.subr.mxu0 0.0
        %1385 = vmatpush1.msra.mxu0 0.0
        %1386 = vmatprep.subr.mxu0 0.0
        %1387 = vmatpush1.msra.mxu0 0.0
        %1388 = vmatprep.subr.mxu0 0.0
        %1389 = vmatpush1.msra.mxu0 0.0
        %1390 = vmatprep.subr.mxu0 0.0
        %1391 = vmatpush1.msra.mxu0 0.0
        %1392 = vmatprep.mubr.f32.mxu0 0.0
        %v1393 = vand.u32 %v821, 4294901760
        %1394 = vmatmul.mubr.f32.gmra.mrb[0].mxu0 %v1393
        %v1395 = vpop.f32.mrb[0].mxu0
        %v1396 = vadd.f32 %v1305, %v1395
        %v1397 = vpop.f32.mrb[0].mxu0
        %1398 = vmatprep.mubr.f32.mxu0 0.0
        %v1399 = vand.u32 %v823, 4294901760
        %1400 = vmatmul.mubr.f32.gmra.mrb[0].mxu0 %v1399
        %v1401 = vpop.f32.mrb[0].mxu0
        %v1402 = vadd.f32 %v1311, %v1401
        %v1403 = vpop.f32.mrb[0].mxu0
        %1404 = vmatprep.mubr.f32.mxu0 0.0
        %v1405 = vand.u32 %v825, 4294901760
        %1406 = vmatmul.mubr.f32.gmra.mrb[0].mxu0 %v1405
        %v1407 = vpop.f32.mrb[0].mxu0
        %v1408 = vadd.f32 %v1317, %v1407
        %v1409 = vpop.f32.mrb[0].mxu0
        %1410 = vmatprep.mubr.f32.mxu0 0.0
        %v1411 = vand.u32 %v827, 4294901760
        %1412 = vmatmul.mubr.f32.gmra.mrb[0].mxu0 %v1411
        %v1413 = vpop.f32.mrb[0].mxu0
        %v1414 = vadd.f32 %v1323, %v1413
        %v1415 = vpop.f32.mrb[0].mxu0
        %1416 = vdwg.mxu0
        %s1417 = scalar_lea.vmem %s163, 64
        %1418 = vst.msk [vmem:[%s1417] sm:$0xff] %vm787, %v1396
        %1419 = vst.msk [vmem:[%s1417 + $0x8] sm:$0xff] %vm787, %v1402
        %1420 = vst.msk [vmem:[%s1417 + $0x10] sm:$0xff] %vm787, %v1408
        %1421 = vst.msk [vmem:[%s1417 + $0x18] sm:$0xff] %vm787, %v1414
        %1426 = vrot.lane.b32.xlu0 %v1396, 120
        %v1427 = vpop.permute.xlu0 %1426
        %1428 = vrot.lane.b32.xlu0 %v1402, 120
        %v1429 = vpop.permute.xlu0 %1428
        %1430 = vrot.lane.b32.xlu0 %v1408, 120
        %v1431 = vpop.permute.xlu0 %1430
        %1432 = vrot.lane.b32.xlu0 %v1414, 120
        %v1433 = vpop.permute.xlu0 %1432
        %s1438 = scalar_lea.vmem %s163, 96
        %1439 = vst.msk [vmem:[%s1438] sm:$0xff] %vm787, %v1427
        %1440 = vst.msk [vmem:[%s1438 + $0x8] sm:$0xff] %vm787, %v1429
        %1441 = vst.msk [vmem:[%s1438 + $0x10] sm:$0xff] %vm787, %v1431
        %1442 = vst.msk [vmem:[%s1438 + $0x18] sm:$0xff] %vm787, %v1433
        %s1443 = smul.u32 4, %s20
        %p1444 = scmp.lt.s32.totalorder %s19, 1
        %s1445 = scalar_select %p1444, %s19, 1
        %p1446 = scmp.lt.s32.totalorder %s1443, 3
        %s1447 = scalar_select %p1446, %s1443, 3
        %s1448 = smul.addr %s1445, 16
        %s1449 = sadd.s32 %s1447, %s1448
        %s1450 = smul.addr %s1449, 8
        %s1451 = scalar_lea.vmem %s1, %s1450
        // Predicated region
        $region29: #{tpu_custom_call.1} parent=23 // pred_check
          %p1452 = pneg %p75
        $region30: #{tpu_custom_call.1} parent=23 // pred_check_branch
          %1454 = sbr.rel (%p1452) target = $region32
        $region31: #{tpu_custom_call.1} parent=23 // pred_region
          %s1455 = smul.u32 4, %s20
        $region32: #{tpu_custom_call.1} parent=23 // pred_fallthru
          _
      $region24: #{tpu_custom_call.1} parent=5 // pred_fallthru
        _
      %p1456 = scmp.le.s32.totalorder 2, %s10
      // Predicated region
      $region33: #{tpu_custom_call.1} parent=5 // pred_check
        %p1457 = pneg %p1456
      $region34: #{tpu_custom_call.1} parent=5 // pred_check_branch
        %1459 = sbr.rel (%p1457) target = $region36
      $region35: #{tpu_custom_call.1} parent=5 // pred_region
        %s1460 = ssub.s32 %s10, 2
        // Predicated region
        $region37: #{tpu_custom_call.1} parent=35 // pred_check
          %p1461 = pneg %p81
        $region38: #{tpu_custom_call.1} parent=35 // pred_check_branch
          %1463 = sbr.rel (%p1461) target = $region40
        $region39: #{tpu_custom_call.1} parent=35 // pred_region
          %s1464 = smul.u32 4, %s22
          %p1465 = scmp.lt.s32.totalorder %s21, 1
          %s1466 = scalar_select %p1465, %s21, 1
          %p1467 = scmp.lt.s32.totalorder %s1464, 3
          %s1468 = scalar_select %p1467, %s1464, 3
          %s1469 = smul.addr %s1466, 16
          %s1470 = sadd.s32 %s1468, %s1469
          %s1471 = smul.addr %s1470, 8
          %s1472 = scalar_lea.vmem %s1, %s1471
        $region40: #{tpu_custom_call.1} parent=35 // pred_fallthru
          _
      $region36: #{tpu_custom_call.1} parent=5 // pred_fallthru
        _
    $region6: #{tpu_custom_call.1} parent=1 // loop_footer
      %s14 = sadd.s32 1, %s10
    $region7: #{tpu_custom_call.1} parent=1 // loop_footer_branch
      %9 = sbr.rel target = $region3
    $region8: #{tpu_custom_call.1} parent=1 // loop_exit
      _
    %1473 = vsyncpa [#allocation3], 1
    %s1474 = scalar_lea.sflag [#allocation3], 1
    %1475 = vsyncpa %s1474, 1

</llo_original>
